<compile_context>
chip_gen: v6e
topology: v6e:2x2x1
jax: 0.10.0
libtpu: 0.0.40
codegen_flags: <defaults>
</compile_context>

<pallas_src>
import functools

import jax
import jax.numpy as jnp
from jax.experimental import pallas as pl
from jax.experimental.pallas import tpu as pltpu


def _encoder_norm_kernel(x_ref, alpha_ref, bias_ref, o_ref, *, eps, d):
    # x_ref: (TILE_ROWS, D) VMEM tile; alpha/bias: (1,) scalars in SMEM.
    x = x_ref[...].astype(jnp.float32)

    # Single-pass row statistics: both reductions come off one pass over the tile.
    s1 = jnp.sum(x, axis=-1, keepdims=True)
    s2 = jnp.sum(x * x, axis=-1, keepdims=True)
    mean = s1 * jnp.float32(1.0 / d)
    # Unbiased variance (ddof=1), matching torch.Tensor.std default:
    #   var = (sum(x^2) - d*mean^2) / (d-1) = (s2 - mean*s1) / (d-1)
    var = (s2 - mean * s1) * jnp.float32(1.0 / (d - 1))
    var = jnp.maximum(var, jnp.float32(0.0))  # guard tiny negatives from cancellation
    std = jnp.sqrt(var)

    # Reference formula: alpha * (x - mean) / sqrt(std + eps) + bias.
    # All stats work stays on the (TILE_ROWS, 1) column; the full-tile work below is
    # a single multiply-add.
    denom = jnp.sqrt(std + jnp.float32(eps))
    inv = pl.reciprocal(denom, approx=False)   # exact: keeps the 1e-5 tolerance
    scale = alpha_ref[0] * inv                 # (TILE_ROWS, 1)
    shift = bias_ref[0] - mean * scale         # (TILE_ROWS, 1)
    o_ref[...] = (x * scale + shift).astype(o_ref.dtype)


def _vmem_capacity_bytes():
    """Per-core VMEM capacity; conservative fallback if the query is unavailable."""
    try:
        cap = getattr(pltpu.get_tpu_info(), "vmem_capacity_bytes", None)
        if cap:
            return int(cap)
    except Exception:
        pass
    return 64 * 1024 * 1024  # v7x per-TC VMEM — a safe lower bound across generations


def _choose_tile_rows(n_rows, d, dtype, vmem_cap):
    """Byte-based row-tile sizing: as large as comfortably fits VMEM, >= 2 grid steps."""
    itemsize = jnp.dtype(dtype).itemsize
    # Sublane packing: 8 rows for 32-bit, 16 for bf16, 32 for int8/fp8.
    row_align = max(8, 32 // max(int(itemsize), 1))
    # Per-row VMEM bytes: double-buffered input + output in native dtype, plus ~2 f32
    # full-tile temporaries (the upcast x and one product) inside the body.
    bytes_per_row = d * (4 * itemsize + 8)
    budget = int(vmem_cap * 0.4)  # leave headroom for compiler scratch & pipelining
    tile = max(budget // max(bytes_per_row, 1), row_align)
    tile = (tile // row_align) * row_align

    # Keep at least 2 grid steps when the input allows it (v7x megacore sharding and
    # compute/DMA overlap); a single (possibly partial) block for tiny inputs is fine.
    half_rows = -(-n_rows // 2)
    half_aligned = -(-half_rows // row_align) * row_align
    tile = min(tile, half_aligned)

    if tile >= n_rows:
        return int(n_rows)  # single full block: block dim == array dim is always legal
    return int(tile)        # multiple of row_align; last block may be partial


def encoder_forward(x, mask, alpha, bias, *, eps=1e-6, tile_rows=None):
    """Encoder.forward: run (empty) EncoderBlock stack, then LayerNormalization."""
    del mask  # mask only feeds the (absent) EncoderBlocks

    B, S, D = x.shape
    assert D > 1, "unbiased std (ddof=1) requires D > 1"
    # TODO(synk): if the production d_model is not a multiple of 128, pack 128//D rows
    # per lane-row with a segmented reduction for lane-dense loads/stores; the usual
    # d_model (256/512/768/1024) already fills lanes with the layout below.
    N = B * S
    x2d = x.reshape(N, D)  # merges leading dims only: no data movement

    vmem_cap = _vmem_capacity_bytes()
    if tile_rows is None:
        tile_rows = _choose_tile_rows(N, D, x.dtype, vmem_cap)

    grid = (pl.cdiv(N, tile_rows),)
    itemsize = jnp.dtype(x.dtype).itemsize
    # ~60% of this chip's VMEM: covers the ~40% tile working set, never exceeds v7x's
    # 64 MiB/TC, and lets v5e/v6e (128 MiB) run much larger blocks.
    vmem_limit = int(vmem_cap * 0.6)

    kernel = functools.partial(_encoder_norm_kernel, eps=eps, d=D)

    out2d = pl.pallas_call(
        kernel,
        out_shape=jax.ShapeDtypeStruct((N, D), x.dtype),
        grid_spec=pltpu.PrefetchScalarGridSpec(
            num_scalar_prefetch=0,
            grid=grid,
            in_specs=[
                pl.BlockSpec((tile_rows, D), lambda i: (i, 0)),
                pl.BlockSpec(memory_space=pltpu.MemorySpace.SMEM),  # alpha (1,)
                pl.BlockSpec(memory_space=pltpu.MemorySpace.SMEM),  # bias  (1,)
            ],
            out_specs=pl.BlockSpec((tile_rows, D), lambda i: (i, 0)),
        ),
        compiler_params=pltpu.CompilerParams(
            dimension_semantics=("parallel",),  # shards row blocks across TCs on v7x
            vmem_limit_bytes=vmem_limit,
        ),
        cost_estimate=pl.CostEstimate(
            flops=6 * N * D,
            transcendentals=3 * N,
            bytes_accessed=2 * N * D * itemsize,
        ),
    )(x2d, alpha, bias)

    return out2d.reshape(B, S, D)


def _reference_jax(x, alpha, bias, eps=1e-6):
    # Pure-JAX reference mirroring the PyTorch LayerNormalization (two-pass form).
    mean = jnp.mean(x, axis=-1, keepdims=True)
    d = x.shape[-1]
    var = jnp.sum((x - mean) ** 2, axis=-1, keepdims=True) / (d - 1)
    std = jnp.sqrt(var)
    return alpha[0] * (x - mean) / jnp.sqrt(std + eps) + bias[0]


if __name__ == "__main__":
    key = jax.random.PRNGKey(0)
    B, S, D = 2, 8, 32

    x = jax.random.normal(key, (B, S, D), dtype=jnp.float32)
    mask = jnp.ones((B, 1, S, S), dtype=jnp.float32)  # unused (no EncoderBlocks)

    # Deterministic parameter init, matching nn.Parameter(torch.ones(1)/zeros(1)).
    alpha = jnp.ones((1,), dtype=jnp.float32)
    bias = jnp.zeros((1,), dtype=jnp.float32)

    out = encoder_forward(x, mask, alpha, bias)
    out = jax.block_until_ready(out)

    ref = _reference_jax(x, alpha, bias)
    assert out.shape == (B, S, D)
    assert jnp.allclose(out, ref, atol=1e-5, rtol=1e-5), "mismatch vs reference"

    print("KERNEL_OK")
</pallas_src>

<mosaic_0001>
module attributes {stable_mosaic.version = 11 : i64} {
  func.func @_encoder_norm_kernel(%arg0: i32, %arg1: memref<8x32xf32, #tpu.memory_space<vmem>>, %arg2: memref<1xf32, #tpu.memory_space<smem>>, %arg3: memref<1xf32, #tpu.memory_space<smem>>, %arg4: memref<8x32xf32, #tpu.memory_space<vmem>>) attributes {dimension_semantics = [#tpu.dimension_semantics<parallel>], iteration_bounds = array<i64: 2>, scalar_prefetch = 0 : i64, scratch_operands = 0 : i64, tpu.core_type = #tpu.core_type<tc>, window_params = [{transform_indices = @transform_0, window_bounds = array<i64: 8, 32>}, {transform_indices = @transform_1, window_bounds = array<i64: 1>}, {transform_indices = @transform_2, window_bounds = array<i64: 1>}, {transform_indices = @transform_3, window_bounds = array<i64: 8, 32>}]} {
    %c0 = arith.constant 0 : index
    %c0_0 = arith.constant 0 : index
    %0 = vector.load %arg1[%c0, %c0_0] : memref<8x32xf32, #tpu.memory_space<vmem>>, vector<8x32xf32>
    %cst = arith.constant dense<0.000000e+00> : vector<8xf32>
    %1 = vector.multi_reduction <add>, %0, %cst [1] : vector<8x32xf32> to vector<8xf32>
    %2 = vector.shape_cast %1 : vector<8xf32> to vector<8x1xf32>
    %3 = arith.mulf %0, %0 : vector<8x32xf32>
    %cst_1 = arith.constant dense<0.000000e+00> : vector<8xf32>
    %4 = vector.multi_reduction <add>, %3, %cst_1 [1] : vector<8x32xf32> to vector<8xf32>
    %5 = vector.shape_cast %4 : vector<8xf32> to vector<8x1xf32>
    %cst_2 = arith.constant 3.125000e-02 : f32
    %6 = vector.broadcast %cst_2 : f32 to vector<8x1xf32>
    %7 = arith.mulf %2, %6 : vector<8x1xf32>
    %8 = arith.mulf %7, %2 : vector<8x1xf32>
    %9 = arith.subf %5, %8 : vector<8x1xf32>
    %cst_3 = arith.constant 0.0322580636 : f32
    %10 = vector.broadcast %cst_3 : f32 to vector<8x1xf32>
    %11 = arith.mulf %9, %10 : vector<8x1xf32>
    %cst_4 = arith.constant 0.000000e+00 : f32
    %12 = vector.broadcast %cst_4 : f32 to vector<8x1xf32>
    %13 = arith.maximumf %11, %12 : vector<8x1xf32>
    %14 = math.sqrt %13 : vector<8x1xf32>
    %cst_5 = arith.constant 9.99999997E-7 : f32
    %15 = vector.broadcast %cst_5 : f32 to vector<8x1xf32>
    %16 = arith.addf %14, %15 : vector<8x1xf32>
    %17 = math.sqrt %16 : vector<8x1xf32>
    %18 = tpu.reciprocal %17 : vector<8x1xf32> -> vector<8x1xf32>
    %c0_6 = arith.constant 0 : index
    %19 = memref.load %arg2[%c0_6] : memref<1xf32, #tpu.memory_space<smem>>
    %20 = vector.broadcast %19 : f32 to vector<8x1xf32>
    %21 = arith.mulf %20, %18 : vector<8x1xf32>
    %c0_7 = arith.constant 0 : index
    %22 = memref.load %arg3[%c0_7] : memref<1xf32, #tpu.memory_space<smem>>
    %23 = arith.mulf %7, %21 : vector<8x1xf32>
    %24 = vector.broadcast %22 : f32 to vector<8x1xf32>
    %25 = arith.subf %24, %23 : vector<8x1xf32>
    %26 = vector.broadcast %21 : vector<8x1xf32> to vector<8x32xf32>
    %27 = arith.mulf %0, %26 : vector<8x32xf32>
    %28 = vector.broadcast %25 : vector<8x1xf32> to vector<8x32xf32>
    %29 = arith.addf %27, %28 : vector<8x32xf32>
    %c0_8 = arith.constant 0 : index
    %c0_9 = arith.constant 0 : index
    %30 = vector.load %arg4[%c0_8, %c0_9] : memref<8x32xf32, #tpu.memory_space<vmem>>, vector<8x32xf32>
    tpu.vector_store %arg4[%c0_8, %c0_9], %29 {strides = array<i32>} : memref<8x32xf32, #tpu.memory_space<vmem>>, vector<8x32xf32>,
    return
  }
  func.func @transform_0(%arg0: i32) -> (i32, i32) {
    %c0_i32 = arith.constant 0 : i32
    %c0_i32_0 = arith.constant 0 : i32
    return %arg0, %c0_i32 : i32, i32
  }
  func.func @transform_1(%arg0: i32) -> i32 {
    %c0_i32 = arith.constant 0 : i32
    %c0_i32_0 = arith.constant 0 : i32
    return %c0_i32 : i32
  }
  func.func @transform_2(%arg0: i32) -> i32 {
    %c0_i32 = arith.constant 0 : i32
    %c0_i32_0 = arith.constant 0 : i32
    return %c0_i32 : i32
  }
  func.func @transform_3(%arg0: i32) -> (i32, i32) {
    %c0_i32 = arith.constant 0 : i32
    %c0_i32_0 = arith.constant 0 : i32
    return %arg0, %c0_i32 : i32, i32
  }
}

</mosaic_0001>

<llo_original>
// kernel: tpu_custom_call.1
$region0: #{tpu_custom_call.1}
  #allocation0 [shape = 'u32[]', space=smem, size = 0x4, offset = 0x4, fixed_abs, tag = 'smem constant byte address 0x4 - core index']
  #allocation1 [shape = 'u32[144,128]{1,0:T(1,128)}', space=vmem, size = 0x12000, scoped, tag = 'internal scratch']
  #allocation2 [shape = 'f32[1]{0:T(128)S(6)}', space=smem, size = 0x200, scoped, tag = 'scoped memory for tpu_custom_call.1']
  #allocation3 [shape = 'f32[1]{0:T(128)S(6)}', space=smem, size = 0x200, scoped, tag = 'scoped memory for tpu_custom_call.1']
  %s0 = inlined_call_operand.hbm [shape: f32[16,32], index: 0, kind: input, shape index: {}]
  %s1 = inlined_call_operand.<no memory space> [shape: f32[1], index: 1, kind: input, shape index: {}]
  %s2 = inlined_call_operand.<no memory space> [shape: f32[1], index: 2, kind: input, shape index: {}]
  %s3 = inlined_call_operand.hbm [shape: f32[16,32], index: 3, kind: output, shape index: {}]
  %s4 = sld [smem:[#allocation0]]
  $region49: #{tpu_custom_call.1} parent=0
    _
  %s6 = ssub.s32 1, %s4
  %s7 = scalar_select 0, %s6, %s4
  %8 = sst [smem:[#allocation2]] %s1
  %9 = sst [smem:[#allocation3]] %s2
  $region1: #{tpu_custom_call.1} parent=0
    #allocation4 [shape = 'u8[8192]{0}', space=vmem, size = 0x2000, scoped, tag = 'input window, operand 0']
    #allocation5 [shape = 's32[2]{0}', space=sflag, size = 0x8, scoped, tag = 'scoped memory for tpu_custom_call.1']
    #allocation6 [shape = 's32[2]{0}', space=sflag, size = 0x8, scoped, tag = 'scoped memory for tpu_custom_call.1']
    #allocation7 [shape = 'u8[8192]{0}', space=vmem, size = 0x2000, scoped, tag = 'output window, operand 0']
    %10 = vsyncpa [#allocation5], 0
    %s11 = scalar_lea.sflag [#allocation5], 1
    %12 = vsyncpa %s11, 0
    %13 = vsyncpa [#allocation6], 0
    %s14 = scalar_lea.sflag [#allocation6], 1
    %15 = vsyncpa %s14, 0
    loop: start=0, step=1, limit=4
    $region2: #{tpu_custom_call.1} parent=1 // loop_pre_header
      _
    $region3: #{tpu_custom_call.1} parent=1 // loop_header
      %s17 = sphi 0, %s21
      %p18 = scmp.ge.s32.totalorder %s17, 4
      %s27 = sphi 0, %s29
      %s30 = sphi 0, %s27
      %s31 = sphi 0, %s30
      %s47 = sphi 0, %s31
      %s51 = sphi 0, %s51
      %s53 = sphi 0, %s51
      %s54 = sphi 0, %s53
      %s68 = sphi 0, %s54
      %s72 = sphi 0, %s72
      %s74 = sphi 0, %s72
      %s75 = sphi 0, %s74
      %s89 = sphi 0, %s75
      %s95 = sphi 0, %s97
      %s98 = sphi 0, %s95
      %s99 = sphi 0, %s98
      %s115 = sphi 0, %s99
    $region4: #{tpu_custom_call.1} parent=1 // loop_header_branch
      %20 = sbr.rel (%p18) target = $region8
    $region5: #{tpu_custom_call.1} parent=1 // loop_body
      %s22 = ssub.s32 %s17, 1
      %s23 = ssub.s32 %s17, 2
      %s24 = sadd.s32 %s17, 1
      %s25 = ssub.s32 %s17, %s24
      %p26 = scmp.eq.s32.totalorder %s25, 0
      %s28 = sadd.s32 %s27, 1
      %s29 = scalar_select %p26, %s27, %s28
      %p32 = pneg %p26
      %p33 = scmp.eq.s32.totalorder %s17, 1
      %p34 = por %p32, %p33
      %p35 = scmp.ne.s32.totalorder %s27, %s30
      %p36 = scmp.eq.s32.totalorder %s17, 0
      %p37 = por %p35, %p36
      %p38 = scmp.ne.s32.totalorder %s27, %s30
      %p39 = scmp.eq.s32.totalorder %s22, 1
      %p40 = por %p38, %p39
      %p41 = scmp.ne.s32.totalorder %s30, %s31
      %p42 = scmp.eq.s32.totalorder %s22, 0
      %p43 = por %p41, %p42
      %p44 = scmp.ne.s32.totalorder %s30, %s31
      %p45 = scmp.eq.s32.totalorder %s23, 1
      %p46 = por %p44, %p45
      %p48 = scmp.ne.s32.totalorder %s31, %s47
      %p49 = scmp.eq.s32.totalorder %s23, 0
      %p50 = por %p48, %p49
      %s52 = sadd.s32 %s51, 1
      %p55 = scmp.eq.s32.totalorder %s17, 1
      %p56 = scmp.ne.s32.totalorder %s51, %s53
      %p57 = scmp.eq.s32.totalorder %s17, 0
      %p58 = por %p56, %p57
      %p59 = scmp.ne.s32.totalorder %s51, %s53
      %p60 = scmp.eq.s32.totalorder %s22, 1
      %p61 = por %p59, %p60
      %p62 = scmp.ne.s32.totalorder %s53, %s54
      %p63 = scmp.eq.s32.totalorder %s22, 0
      %p64 = por %p62, %p63
      %p65 = scmp.ne.s32.totalorder %s53, %s54
      %p66 = scmp.eq.s32.totalorder %s23, 1
      %p67 = por %p65, %p66
      %p69 = scmp.ne.s32.totalorder %s54, %s68
      %p70 = scmp.eq.s32.totalorder %s23, 0
      %p71 = por %p69, %p70
      %s73 = sadd.s32 %s72, 1
      %p76 = scmp.eq.s32.totalorder %s17, 1
      %p77 = scmp.ne.s32.totalorder %s72, %s74
      %p78 = scmp.eq.s32.totalorder %s17, 0
      %p79 = por %p77, %p78
      %p80 = scmp.ne.s32.totalorder %s72, %s74
      %p81 = scmp.eq.s32.totalorder %s22, 1
      %p82 = por %p80, %p81
      %p83 = scmp.ne.s32.totalorder %s74, %s75
      %p84 = scmp.eq.s32.totalorder %s22, 0
      %p85 = por %p83, %p84
      %p86 = scmp.ne.s32.totalorder %s74, %s75
      %p87 = scmp.eq.s32.totalorder %s23, 1
      %p88 = por %p86, %p87
      %p90 = scmp.ne.s32.totalorder %s75, %s89
      %p91 = scmp.eq.s32.totalorder %s23, 0
      %p92 = por %p90, %p91
      %s93 = ssub.s32 %s17, %s24
      %p94 = scmp.eq.s32.totalorder %s93, 0
      %s96 = sadd.s32 %s95, 1
      %s97 = scalar_select %p94, %s95, %s96
      %p100 = pneg %p94
      %p101 = scmp.eq.s32.totalorder %s17, 1
      %p102 = por %p100, %p101
      %p103 = scmp.ne.s32.totalorder %s95, %s98
      %p104 = scmp.eq.s32.totalorder %s17, 0
      %p105 = por %p103, %p104
      %p106 = scmp.ne.s32.totalorder %s95, %s98
      %p107 = scmp.eq.s32.totalorder %s22, 1
      %p108 = por %p106, %p107
      %p109 = scmp.ne.s32.totalorder %s98, %s99
      %p110 = scmp.eq.s32.totalorder %s22, 0
      %p111 = por %p109, %p110
      %p112 = scmp.ne.s32.totalorder %s98, %s99
      %p113 = scmp.eq.s32.totalorder %s23, 1
      %p114 = por %p112, %p113
      %p116 = scmp.ne.s32.totalorder %s99, %s115
      %p117 = scmp.eq.s32.totalorder %s23, 0
      %p118 = por %p116, %p117
      %p119 = scmp.le.s32.totalorder 1, %s17
      %p120 = scmp.lt.s32.totalorder %s17, 3
      %p121 = pnand %p119, %p120
      %p122 = pneg %p121
      // Predicated region
      $region9: #{tpu_custom_call.1} parent=5 // pred_check
        _
      $region10: #{tpu_custom_call.1} parent=5 // pred_check_branch
        %124 = sbr.rel (%p121) target = $region12
      $region11: #{tpu_custom_call.1} parent=5 // pred_region
        %s125 = ssub.s32 %s17, 1
        // Predicated region
        $region13: #{tpu_custom_call.1} parent=11 // pred_check
          %p126 = pneg %p64
        $region14: #{tpu_custom_call.1} parent=11 // pred_check_branch
          %128 = sbr.rel (%p126) target = $region16
        $region15: #{tpu_custom_call.1} parent=11 // pred_region
          _
        $region16: #{tpu_custom_call.1} parent=11 // pred_fallthru
          _
        // Predicated region
        $region17: #{tpu_custom_call.1} parent=11 // pred_check
          %p129 = pneg %p85
        $region18: #{tpu_custom_call.1} parent=11 // pred_check_branch
          %131 = sbr.rel (%p129) target = $region20
        $region19: #{tpu_custom_call.1} parent=11 // pred_region
          _
        $region20: #{tpu_custom_call.1} parent=11 // pred_fallthru
          _
      $region12: #{tpu_custom_call.1} parent=5 // pred_fallthru
        _
      %p132 = scmp.lt.s32.totalorder %s17, 2
      // Predicated region
      $region21: #{tpu_custom_call.1} parent=5 // pred_check
        %p133 = pneg %p132
      $region22: #{tpu_custom_call.1} parent=5 // pred_check_branch
        %135 = sbr.rel (%p133) target = $region24
      $region23: #{tpu_custom_call.1} parent=5 // pred_region
        // Predicated region
        $region25: #{tpu_custom_call.1} parent=23 // pred_check
          %p136 = pneg %p37
        $region26: #{tpu_custom_call.1} parent=23 // pred_check_branch
          %138 = sbr.rel (%p136) target = $region28
        $region27: #{tpu_custom_call.1} parent=23 // pred_region
          %s139 = sand.u32 %s27, 1
          %s140 = scalar_lea.sflag [#allocation5], %s139
          %s141 = sand.u32 %s27, 1
          %s142 = smul.addr %s141, 8
          %s143 = scalar_lea.vmem [#allocation4], %s142
          %s145 = ssub.s32 128, 128
          %146 = vsyncadd %s140, %s145
          %s147 = smul.addr %s17, 128
          %s148 = scalar_lea.hbm %s0, %s147
          %s150 = sshll.u32 %s143, 4
          %s151 = int_to_ptr.vmem [resolvable:$true] %s150
          %153 = dma.hbm_to_vmem [thread:$0]  %s148, 128, %s151, %s140
        $region28: #{tpu_custom_call.1} parent=23 // pred_fallthru
          _
      $region24: #{tpu_custom_call.1} parent=5 // pred_fallthru
        _
      %p154 = scmp.le.s32.totalorder 1, %s17
      %p155 = scmp.lt.s32.totalorder %s17, 3
      %p156 = pnand %p154, %p155
      %p157 = pneg %p156
      // Predicated region
      $region29: #{tpu_custom_call.1} parent=5 // pred_check
        _
      $region30: #{tpu_custom_call.1} parent=5 // pred_check_branch
        %159 = sbr.rel (%p156) target = $region32
      $region31: #{tpu_custom_call.1} parent=5 // pred_region
        %s160 = ssub.s32 %s17, 1
        %s161 = sand.u32 %s30, 1
        %s162 = scalar_lea.sflag [#allocation5], %s161
        %s163 = sand.u32 %s30, 1
        %s164 = smul.addr %s163, 8
        %s165 = scalar_lea.vmem [#allocation4], %s164
        // Predicated region
        $region33: #{tpu_custom_call.1} parent=31 // pred_check
          %p166 = pneg %p43
        $region34: #{tpu_custom_call.1} parent=31 // pred_check_branch
          %168 = sbr.rel (%p166) target = $region36
        $region35: #{tpu_custom_call.1} parent=31 // pred_region
          %169 = dma.done %s162, 128
        $region36: #{tpu_custom_call.1} parent=31 // pred_fallthru
          _
        %s170 = sand.u32 %s30, 1
        %s171 = scalar_lea.sflag [#allocation5], %s170
        %s172 = sand.u32 %s30, 1
        %s173 = smul.addr %s172, 8
        %s174 = scalar_lea.vmem [#allocation4], %s173
        %p175 = pneg %p43
        %p176 = pneg %p40
        %p177 = pneg %p64
        %p178 = pneg %p61
        %p179 = pneg %p85
        %p180 = pneg %p82
        %p181 = pneg %p111
        %p182 = pneg %p108
        %s183 = sand.u32 %s98, 1
        %s184 = scalar_lea.sflag [#allocation6], %s183
        %s185 = sand.u32 %s98, 1
        %s186 = smul.addr %s185, 8
        %s187 = scalar_lea.vmem [#allocation7], %s186
        %v188 = vld [vmem:[%s165] sm:$0xff]
        %vm189 = vcmask 261120
        %v190 = vsel %vm189, %v188, 0.0
        %191 = vadd.xlane.f32.xlu0 %v190
        %v192 = vpop.xlane.xlu0 %191
        %v193 = vmul.f32 %v188, %v188
        %v194 = vsel %vm189, %v193, 0.0
        %195 = vadd.xlane.f32.xlu0 %v194
        %v196 = vpop.xlane.xlu0 %195
        %v197 = vmul.f32 %v192, 0.03125
        %v198 = vmul.f32 %v197, %v192
        %v199 = vsub.f32 %v196, %v198
        %v200 = vmul.f32 %v199, 0.032258064
        %v201 = vmax.f32 %v200, 0.0
        %v202 = vrsqrt.pop %v201
        %v203 = vmul.f32 %v201, %v202
        %vm204 = vcmp.eq.f32.partialorder %v201, inf
        %v205 = vsel %vm204, %v201, %v203
        %vm206 = vcmp.eq.f32.partialorder %v201, 0.0
        %v207 = vand.u32 %v201, 2147483648
        %v208 = vsel %vm206, %v207, %v205
        %v209 = vadd.f32 %v208, 1e-06
        %v210 = vrsqrt.pop %v209
        %v211 = vmul.f32 %v209, %v210
        %vm212 = vcmp.eq.f32.partialorder %v209, inf
        %v213 = vsel %vm212, %v209, %v211
        %vm214 = vcmp.eq.f32.partialorder %v209, 0.0
        %v215 = vand.u32 %v209, 2147483648
        %v216 = vsel %vm214, %v215, %v213
        %v217 = vrcp.pop %v216
        %s218 = sld [smem:[#allocation2]]
        %v219 = vstv %s218
        %v220 = vmul.f32 %v219, %v217
        %s221 = sld [smem:[#allocation3]]
        %v222 = vmul.f32 %v197, %v220
        %v223 = vstv %s221
        %v224 = vsub.f32 %v223, %v222
        %v225 = vmul.f32 %v188, %v220
        %v226 = vadd.f32 %v225, %v224
        %227 = vst.msk [vmem:[%s187] sm:$0xff] %vm189, %v226
        %s228 = sand.u32 %s98, 1
        %s229 = scalar_lea.sflag [#allocation6], %s228
        %s230 = sand.u32 %s98, 1
        %s231 = smul.addr %s230, 8
        %s232 = scalar_lea.vmem [#allocation7], %s231
        // Predicated region
        $region37: #{tpu_custom_call.1} parent=31 // pred_check
          %p233 = pneg %p108
        $region38: #{tpu_custom_call.1} parent=31 // pred_check_branch
          %235 = sbr.rel (%p233) target = $region40
        $region39: #{tpu_custom_call.1} parent=31 // pred_region
          %s237 = ssub.s32 128, 128
          %238 = vsyncadd %s229, %s237
          %s239 = smul.addr %s22, 128
          %s240 = scalar_lea.hbm %s3, %s239
          %s242 = sshll.u32 %s232, 4
          %s243 = int_to_ptr.vmem [resolvable:$true] %s242
          %245 = dma.vmem_to_hbm [thread:$0]  %s243, 128, %s240, %s229
        $region40: #{tpu_custom_call.1} parent=31 // pred_fallthru
          _
      $region32: #{tpu_custom_call.1} parent=5 // pred_fallthru
        _
      %p246 = scmp.le.s32.totalorder 2, %s17
      // Predicated region
      $region41: #{tpu_custom_call.1} parent=5 // pred_check
        %p247 = pneg %p246
      $region42: #{tpu_custom_call.1} parent=5 // pred_check_branch
        %249 = sbr.rel (%p247) target = $region44
      $region43: #{tpu_custom_call.1} parent=5 // pred_region
        %s250 = ssub.s32 %s17, 2
        // Predicated region
        $region45: #{tpu_custom_call.1} parent=43 // pred_check
          %p251 = pneg %p114
        $region46: #{tpu_custom_call.1} parent=43 // pred_check_branch
          %253 = sbr.rel (%p251) target = $region48
        $region47: #{tpu_custom_call.1} parent=43 // pred_region
          %s254 = sand.u32 %s99, 1
          %s255 = scalar_lea.sflag [#allocation6], %s254
          %s256 = sand.u32 %s99, 1
          %s257 = smul.addr %s256, 8
          %s258 = scalar_lea.vmem [#allocation7], %s257
          %259 = dma.done %s255, 128
        $region48: #{tpu_custom_call.1} parent=43 // pred_fallthru
          _
      $region44: #{tpu_custom_call.1} parent=5 // pred_fallthru
        _
    $region6: #{tpu_custom_call.1} parent=1 // loop_footer
      %s21 = sadd.s32 1, %s17
    $region7: #{tpu_custom_call.1} parent=1 // loop_footer_branch
      %16 = sbr.rel target = $region3
    $region8: #{tpu_custom_call.1} parent=1 // loop_exit
      _
    %260 = vsyncpa [#allocation5], 1
    %s261 = scalar_lea.sflag [#allocation5], 1
    %262 = vsyncpa %s261, 1
    %263 = vsyncpa [#allocation6], 1
    %s264 = scalar_lea.sflag [#allocation6], 1
    %265 = vsyncpa %s264, 1

</llo_original>
